<compile_context>
chip_gen: v6e
topology: v6e:2x2x1
jax: 0.10.0
libtpu: 0.0.40
codegen_flags: <defaults>
</compile_context>

<pallas_src>
import functools

import jax
import jax.numpy as jnp
from jax.experimental import pallas as pl
from jax.experimental.pallas import tpu as pltpu

HIDDEN = 100          # logical hidden size (matches the torch module)
LANE = 128


def _round_up(v, m):
    return ((v + m - 1) // m) * m


def _pad_to(a, shape):
    pads = [(0, t - s) for s, t in zip(a.shape, shape)]
    return jnp.pad(a, pads)


# --------------------------------------------------------------------------- #
# Kernel: fused 3-layer MLP on one (TM, *) batch tile; h1/h2 never leave VMEM.
# --------------------------------------------------------------------------- #
def mlp_kernel(x_ref, w1_ref, b1_ref, w2_ref, b2_ref, w3_ref, b3_ref, o_ref):
    w_dt = w1_ref.dtype                       # bf16 (default) or f32 operands
    x = x_ref[...].astype(w_dt)

    h1 = jnp.dot(x, w1_ref[...], preferred_element_type=jnp.float32) + b1_ref[...]
    h1 = jnp.maximum(h1, 0.0)                 # ReLU in f32

    h2 = jnp.dot(h1.astype(w_dt), w2_ref[...],
                 preferred_element_type=jnp.float32) + b2_ref[...]
    h2 = jnp.maximum(h2, 0.0)                 # ReLU in f32

    out = jnp.dot(h2.astype(w_dt), w3_ref[...],
                  preferred_element_type=jnp.float32) + b3_ref[...]
    o_ref[...] = out.astype(o_ref.dtype)


# --------------------------------------------------------------------------- #
# One-time parameter preparation (pad to lane-aligned shapes, cast MXU operands)
# --------------------------------------------------------------------------- #
def prepare_params(params, *, compute_dtype=jnp.bfloat16, lane=LANE):
    """Pad weights/biases to lane-aligned shapes and cast matmul operands.

    Call once at init; reusing the result removes the per-forward pad/convert
    passes. Zero padding of hidden/output columns is mathematically inert.
    Biases stay f32 (bias add / ReLU are done in f32 after f32 accumulation).
    """
    w1, b1, w2, b2, w3, b3 = (params[k] for k in ("w1", "b1", "w2", "b2", "w3", "b3"))
    in_dim, hidden = w1.shape
    out_dim = w3.shape[1]
    hidden_pad = _round_up(hidden, lane)
    out_pad = _round_up(out_dim, lane)
    return {
        "w1": _pad_to(w1, (in_dim, hidden_pad)).astype(compute_dtype),
        "b1": _pad_to(b1, (1, hidden_pad)).astype(jnp.float32),
        "w2": _pad_to(w2, (hidden_pad, hidden_pad)).astype(compute_dtype),
        "b2": _pad_to(b2, (1, hidden_pad)).astype(jnp.float32),
        "w3": _pad_to(w3, (hidden_pad, out_pad)).astype(compute_dtype),
        "b3": _pad_to(b3, (1, out_pad)).astype(jnp.float32),
    }


# --------------------------------------------------------------------------- #
# Forward pass
# --------------------------------------------------------------------------- #
@functools.partial(jax.jit, static_argnames=("out_dim", "tm_max", "nb_target"))
def network_forward(x, prepared, out_dim, *, tm_max=512, nb_target=8):
    """x: (B, input_dim) f32. prepared: output of prepare_params. Returns (B, out_dim) f32."""
    w1p, b1p, w2p, b2p, w3p, b3p = (prepared[k]
                                    for k in ("w1", "b1", "w2", "b2", "w3", "b3"))
    B, in_dim = x.shape
    hidden_pad = w1p.shape[1]
    out_pad = w3p.shape[1]

    # Batch tiling: aim for ~nb_target grid steps (dual-core occupancy on v7x +
    # DMA/compute overlap), 8-sublane aligned, minimal pad waste, capped at tm_max.
    tm = max(8, min(tm_max, _round_up(pl.cdiv(B, nb_target), 8)))
    nb = pl.cdiv(B, tm)

    # Advisory cost hint for the XLA scheduler.
    b_eff = nb * tm
    flops = 2 * b_eff * (in_dim * hidden_pad + hidden_pad * hidden_pad
                         + hidden_pad * out_pad)
    w_bytes = sum(int(a.size) * a.dtype.itemsize
                  for a in (w1p, b1p, w2p, b2p, w3p, b3p))
    bytes_accessed = int(x.size) * x.dtype.itemsize + B * out_pad * 4 + w_bytes

    out_padded = pl.pallas_call(
        mlp_kernel,
        out_shape=jax.ShapeDtypeStruct((B, out_pad), jnp.float32),
        grid=(nb,),
        in_specs=[
            pl.BlockSpec((tm, in_dim), lambda i: (i, 0)),            # streamed x tile (ragged last block OK)
            pl.BlockSpec((in_dim, hidden_pad), lambda i: (0, 0)),    # VMEM-resident weights
            pl.BlockSpec((1, hidden_pad), lambda i: (0, 0)),
            pl.BlockSpec((hidden_pad, hidden_pad), lambda i: (0, 0)),
            pl.BlockSpec((1, hidden_pad), lambda i: (0, 0)),
            pl.BlockSpec((hidden_pad, out_pad), lambda i: (0, 0)),
            pl.BlockSpec((1, out_pad), lambda i: (0, 0)),
        ],
        out_specs=pl.BlockSpec((tm, out_pad), lambda i: (i, 0)),     # lane-dense store, ragged rows masked
        compiler_params=pltpu.CompilerParams(
            dimension_semantics=("parallel",)),                      # megacore sharding on v7x
        cost_estimate=pl.CostEstimate(flops=flops, transcendentals=0,
                                      bytes_accessed=bytes_accessed),
    )(x, w1p, b1p, w2p, b2p, w3p, b3p)

    # Column slice back to the logical output width (cheap; downstream consumers
    # that accept the 128-wide padded buffer can take `out_padded` directly).
    return out_padded[:, :out_dim]


# --------------------------------------------------------------------------- #
# Init / reference
# --------------------------------------------------------------------------- #
def init_params(key, input_dim, output_dim, hidden=HIDDEN):
    # torch.nn.Linear default init: U(-1/sqrt(fan_in), 1/sqrt(fan_in)).
    ks = jax.random.split(key, 6)

    def linear(kw, kb, fan_in, fan_out):
        bound = 1.0 / jnp.sqrt(jnp.float32(fan_in))
        w = jax.random.uniform(kw, (fan_in, fan_out), jnp.float32, -bound, bound)
        b = jax.random.uniform(kb, (1, fan_out), jnp.float32, -bound, bound)
        return w, b

    w1, b1 = linear(ks[0], ks[1], input_dim, hidden)
    w2, b2 = linear(ks[2], ks[3], hidden, hidden)
    w3, b3 = linear(ks[4], ks[5], hidden, output_dim)
    return {"w1": w1, "b1": b1, "w2": w2, "b2": b2, "w3": w3, "b3": b3}


def reference_forward(x, params):
    h1 = jnp.maximum(x @ params["w1"] + params["b1"], 0.0)
    h2 = jnp.maximum(h1 @ params["w2"] + params["b2"], 0.0)
    return h2 @ params["w3"] + params["b3"]


if __name__ == "__main__":
    key = jax.random.PRNGKey(0)
    k_x, k_p, k_x2 = jax.random.split(key, 3)

    batch, input_dim, output_dim = 2, 32, 8
    params = init_params(k_p, input_dim, output_dim)

    # One-time parameter prep (done at init, not per forward).
    prepared_bf16 = jax.block_until_ready(prepare_params(params))                       # default: bf16 MXU operands
    prepared_f32 = jax.block_until_ready(prepare_params(params, compute_dtype=jnp.float32))

    # --- small batch (as in the original spec's usage) -------------------------
    x = jax.random.normal(k_x, (batch, input_dim), jnp.float32)
    ref = reference_forward(x, params)

    out_f32 = jax.block_until_ready(network_forward(x, prepared_f32, output_dim))
    assert out_f32.shape == (batch, output_dim)
    assert jnp.allclose(out_f32, ref, atol=1e-4, rtol=1e-4), "f32 path mismatch (B=2)"

    out_bf16 = jax.block_until_ready(network_forward(x, prepared_bf16, output_dim))
    assert out_bf16.shape == (batch, output_dim)
    assert jnp.allclose(out_bf16, ref, atol=3e-2, rtol=3e-2), "bf16 path mismatch (B=2)"

    # --- larger batch: multiple grid steps, ragged last block masked on store --
    big_b = 1000  # deliberately not a multiple of the tile size
    x2 = jax.random.normal(k_x2, (big_b, input_dim), jnp.float32)
    ref2 = reference_forward(x2, params)

    out2_f32 = jax.block_until_ready(network_forward(x2, prepared_f32, output_dim, tm_max=256))
    assert out2_f32.shape == (big_b, output_dim)
    assert jnp.allclose(out2_f32, ref2, atol=1e-4, rtol=1e-4), "f32 path mismatch (B=1000)"

    out2_bf16 = jax.block_until_ready(network_forward(x2, prepared_bf16, output_dim, tm_max=256))
    assert out2_bf16.shape == (big_b, output_dim)
    assert jnp.allclose(out2_bf16, ref2, atol=3e-2, rtol=3e-2), "bf16 path mismatch (B=1000)"

    print("KERNEL_OK")
</pallas_src>

<mosaic_0001>
module attributes {stable_mosaic.version = 11 : i64} {
  func.func @mlp_kernel(%arg0: i32, %arg1: memref<8x32xf32, #tpu.memory_space<vmem>>, %arg2: memref<32x128xf32, #tpu.memory_space<vmem>>, %arg3: memref<1x128xf32, #tpu.memory_space<vmem>>, %arg4: memref<128x128xf32, #tpu.memory_space<vmem>>, %arg5: memref<1x128xf32, #tpu.memory_space<vmem>>, %arg6: memref<128x128xf32, #tpu.memory_space<vmem>>, %arg7: memref<1x128xf32, #tpu.memory_space<vmem>>, %arg8: memref<8x128xf32, #tpu.memory_space<vmem>>) attributes {dimension_semantics = [#tpu.dimension_semantics<parallel>], iteration_bounds = array<i64: 1>, scalar_prefetch = 0 : i64, scratch_operands = 0 : i64, tpu.core_type = #tpu.core_type<tc>, window_params = [{transform_indices = @transform_0, window_bounds = array<i64: 8, 32>}, {pipeline_mode = #tpu.pipeline_mode<synchronous>, transform_indices = @transform_1, window_bounds = array<i64: 32, 128>}, {pipeline_mode = #tpu.pipeline_mode<synchronous>, transform_indices = @transform_2, window_bounds = array<i64: 1, 128>}, {pipeline_mode = #tpu.pipeline_mode<synchronous>, transform_indices = @transform_3, window_bounds = array<i64: 128, 128>}, {pipeline_mode = #tpu.pipeline_mode<synchronous>, transform_indices = @transform_4, window_bounds = array<i64: 1, 128>}, {pipeline_mode = #tpu.pipeline_mode<synchronous>, transform_indices = @transform_5, window_bounds = array<i64: 128, 128>}, {pipeline_mode = #tpu.pipeline_mode<synchronous>, transform_indices = @transform_6, window_bounds = array<i64: 1, 128>}, {transform_indices = @transform_7, window_bounds = array<i64: 8, 128>}]} {
    %c0 = arith.constant 0 : index
    %c0_0 = arith.constant 0 : index
    %0 = vector.load %arg1[%c0, %c0_0] : memref<8x32xf32, #tpu.memory_space<vmem>>, vector<8x32xf32>
    %c0_1 = arith.constant 0 : index
    %c0_2 = arith.constant 0 : index
    %1 = vector.load %arg2[%c0_1, %c0_2] : memref<32x128xf32, #tpu.memory_space<vmem>>, vector<32x128xf32>
    %cst = arith.constant dense<0.000000e+00> : vector<8x128xf32>
    %2 = tpu.matmul %0, %1, %cst {dimension_numbers = #tpu.dot_dimension_numbers<[1], [0], [0], [1], [0, 0, 1, 1], [], []>} : vector<8x32xf32>, vector<32x128xf32>, vector<8x128xf32> -> vector<8x128xf32>
    %c0_3 = arith.constant 0 : index
    %c0_4 = arith.constant 0 : index
    %3 = vector.load %arg3[%c0_3, %c0_4] : memref<1x128xf32, #tpu.memory_space<vmem>>, vector<1x128xf32>
    %4 = vector.broadcast %3 : vector<1x128xf32> to vector<8x128xf32>
    %5 = arith.addf %2, %4 : vector<8x128xf32>
    %cst_5 = arith.constant 0.000000e+00 : f32
    %6 = vector.broadcast %cst_5 : f32 to vector<8x128xf32>
    %7 = arith.maximumf %5, %6 : vector<8x128xf32>
    %c0_6 = arith.constant 0 : index
    %c0_7 = arith.constant 0 : index
    %8 = vector.load %arg4[%c0_6, %c0_7] : memref<128x128xf32, #tpu.memory_space<vmem>>, vector<128x128xf32>
    %cst_8 = arith.constant dense<0.000000e+00> : vector<8x128xf32>
    %9 = tpu.matmul %7, %8, %cst_8 {dimension_numbers = #tpu.dot_dimension_numbers<[1], [0], [0], [1], [0, 0, 1, 1], [], []>} : vector<8x128xf32>, vector<128x128xf32>, vector<8x128xf32> -> vector<8x128xf32>
    %c0_9 = arith.constant 0 : index
    %c0_10 = arith.constant 0 : index
    %10 = vector.load %arg5[%c0_9, %c0_10] : memref<1x128xf32, #tpu.memory_space<vmem>>, vector<1x128xf32>
    %11 = vector.broadcast %10 : vector<1x128xf32> to vector<8x128xf32>
    %12 = arith.addf %9, %11 : vector<8x128xf32>
    %cst_11 = arith.constant 0.000000e+00 : f32
    %13 = vector.broadcast %cst_11 : f32 to vector<8x128xf32>
    %14 = arith.maximumf %12, %13 : vector<8x128xf32>
    %c0_12 = arith.constant 0 : index
    %c0_13 = arith.constant 0 : index
    %15 = vector.load %arg6[%c0_12, %c0_13] : memref<128x128xf32, #tpu.memory_space<vmem>>, vector<128x128xf32>
    %cst_14 = arith.constant dense<0.000000e+00> : vector<8x128xf32>
    %16 = tpu.matmul %14, %15, %cst_14 {dimension_numbers = #tpu.dot_dimension_numbers<[1], [0], [0], [1], [0, 0, 1, 1], [], []>} : vector<8x128xf32>, vector<128x128xf32>, vector<8x128xf32> -> vector<8x128xf32>
    %c0_15 = arith.constant 0 : index
    %c0_16 = arith.constant 0 : index
    %17 = vector.load %arg7[%c0_15, %c0_16] : memref<1x128xf32, #tpu.memory_space<vmem>>, vector<1x128xf32>
    %18 = vector.broadcast %17 : vector<1x128xf32> to vector<8x128xf32>
    %19 = arith.addf %16, %18 : vector<8x128xf32>
    %c0_17 = arith.constant 0 : index
    %c0_18 = arith.constant 0 : index
    %20 = vector.load %arg8[%c0_17, %c0_18] : memref<8x128xf32, #tpu.memory_space<vmem>>, vector<8x128xf32>
    tpu.vector_store %arg8[%c0_17, %c0_18], %19 {strides = array<i32>} : memref<8x128xf32, #tpu.memory_space<vmem>>, vector<8x128xf32>,
    return
  }
  func.func @transform_0(%arg0: i32) -> (i32, i32) {
    %c0_i32 = arith.constant 0 : i32
    %c0_i32_0 = arith.constant 0 : i32
    return %arg0, %c0_i32 : i32, i32
  }
  func.func @transform_1(%arg0: i32) -> (i32, i32) {
    %c0_i32 = arith.constant 0 : i32
    %c0_i32_0 = arith.constant 0 : i32
    %c0_i32_1 = arith.constant 0 : i32
    return %c0_i32, %c0_i32_0 : i32, i32
  }
  func.func @transform_2(%arg0: i32) -> (i32, i32) {
    %c0_i32 = arith.constant 0 : i32
    %c0_i32_0 = arith.constant 0 : i32
    %c0_i32_1 = arith.constant 0 : i32
    return %c0_i32, %c0_i32_0 : i32, i32
  }
  func.func @transform_3(%arg0: i32) -> (i32, i32) {
    %c0_i32 = arith.constant 0 : i32
    %c0_i32_0 = arith.constant 0 : i32
    %c0_i32_1 = arith.constant 0 : i32
    return %c0_i32, %c0_i32_0 : i32, i32
  }
  func.func @transform_4(%arg0: i32) -> (i32, i32) {
    %c0_i32 = arith.constant 0 : i32
    %c0_i32_0 = arith.constant 0 : i32
    %c0_i32_1 = arith.constant 0 : i32
    return %c0_i32, %c0_i32_0 : i32, i32
  }
  func.func @transform_5(%arg0: i32) -> (i32, i32) {
    %c0_i32 = arith.constant 0 : i32
    %c0_i32_0 = arith.constant 0 : i32
    %c0_i32_1 = arith.constant 0 : i32
    return %c0_i32, %c0_i32_0 : i32, i32
  }
  func.func @transform_6(%arg0: i32) -> (i32, i32) {
    %c0_i32 = arith.constant 0 : i32
    %c0_i32_0 = arith.constant 0 : i32
    %c0_i32_1 = arith.constant 0 : i32
    return %c0_i32, %c0_i32_0 : i32, i32
  }
  func.func @transform_7(%arg0: i32) -> (i32, i32) {
    %c0_i32 = arith.constant 0 : i32
    %c0_i32_0 = arith.constant 0 : i32
    return %arg0, %c0_i32 : i32, i32
  }
}

</mosaic_0001>

<llo_original>
// kernel: network_forward.1
$region0: #{network_forward.1}
  #allocation0 [shape = 'u32[]', space=smem, size = 0x4, offset = 0x4, fixed_abs, tag = 'smem constant byte address 0x4 - core index']
  #allocation1 [shape = 'u32[144,128]{1,0:T(1,128)}', space=vmem, size = 0x12000, scoped, tag = 'internal scratch']
  %s0 = inlined_call_operand.hbm [shape: f32[2,32], index: 0, kind: input, shape index: {}]
  %s1 = inlined_call_operand.hbm [shape: f32[32,128], index: 1, kind: input, shape index: {}]
  %s2 = inlined_call_operand.vmem [shape: f32[1,128], index: 2, kind: input, shape index: {}]
  %s3 = inlined_call_operand.hbm [shape: f32[128,128], index: 3, kind: input, shape index: {}]
  %s4 = inlined_call_operand.vmem [shape: f32[1,128], index: 4, kind: input, shape index: {}]
  %s5 = inlined_call_operand.hbm [shape: f32[128,128], index: 5, kind: input, shape index: {}]
  %s6 = inlined_call_operand.vmem [shape: f32[1,128], index: 6, kind: input, shape index: {}]
  %s7 = inlined_call_operand.hbm [shape: f32[2,128], index: 7, kind: output, shape index: {}]
  %s8 = sld [smem:[#allocation0]]
  $region54: #{network_forward.1} parent=0
    _
  %s10 = ssub.s32 1, %s8
  %s11 = scalar_select 0, %s10, %s8
  $region1: #{network_forward.1} parent=0
    #allocation2 [shape = 'u8[4096]{0}', space=vmem, size = 0x1000, scoped, tag = 'input window, operand 0, single buffered']
    #allocation3 [shape = 's32[1]{0}', space=sflag, size = 0x4, scoped, tag = 'scoped memory for network_forward.1']
    #allocation4 [shape = 's32[1]{0}', space=sflag, size = 0x4, scoped, tag = 'scoped memory for network_forward.1']
    #allocation5 [shape = 'u8[16384]{0}', space=vmem, size = 0x4000, scoped, tag = 'input window, operand 1, single buffered']
    #allocation6 [shape = 's32[1]{0}', space=sflag, size = 0x4, scoped, tag = 'scoped memory for network_forward.1']
    #allocation7 [shape = 'u8[65536]{0}', space=vmem, size = 0x10000, scoped, tag = 'input window, operand 3, single buffered']
    #allocation8 [shape = 'u8[65536]{0}', space=vmem, size = 0x10000, scoped, tag = 'input window, operand 5, single buffered']
    #allocation9 [shape = 's32[1]{0}', space=sflag, size = 0x4, scoped, tag = 'scoped memory for network_forward.1']
    #allocation10 [shape = 'u8[4096]{0}', space=vmem, size = 0x1000, scoped, tag = 'output window, operand 0, single buffered']
    %12 = vsyncpa [#allocation3], 0
    %13 = vsyncpa [#allocation6], 0
    %14 = vsyncpa [#allocation9], 0
    %15 = vsyncpa [#allocation4], 0
    // Predicated region
    $region2: #{network_forward.1} parent=1 // pred_check
      _
    $region3: #{network_forward.1} parent=1 // pred_check_branch
      %17 = sbr.rel (0) target = $region5
    $region4: #{network_forward.1} parent=1 // pred_region
      %s19 = ssub.s32 128, 32
      %20 = vsyncadd [#allocation3], %s19
      %s21 = sshll.u32 [#allocation2], 4
      %s22 = int_to_ptr.vmem [resolvable:$true] %s21
      %27 = dma.hbm_to_vmem [thread:$0]  %s0, 32, %s22, [#allocation3], 32, 32, 2
    $region5: #{network_forward.1} parent=1 // pred_fallthru
      _
    // Predicated region
    $region6: #{network_forward.1} parent=1 // pred_check
      _
    $region7: #{network_forward.1} parent=1 // pred_check_branch
      %29 = sbr.rel (0) target = $region9
    $region8: #{network_forward.1} parent=1 // pred_region
      %s31 = ssub.s32 512, 512
      %32 = vsyncadd [#allocation6], %s31
      %s33 = sshll.u32 [#allocation5], 4
      %s34 = int_to_ptr.vmem [resolvable:$true] %s33
      %39 = dma.hbm_to_vmem [thread:$0]  %s1, 512, %s34, [#allocation6], 128, 128, 8
    $region9: #{network_forward.1} parent=1 // pred_fallthru
      _
    // Predicated region
    $region10: #{network_forward.1} parent=1 // pred_check
      _
    $region11: #{network_forward.1} parent=1 // pred_check_branch
      %41 = sbr.rel (0) target = $region13
    $region12: #{network_forward.1} parent=1 // pred_region
      _
    $region13: #{network_forward.1} parent=1 // pred_fallthru
      _
    // Predicated region
    $region14: #{network_forward.1} parent=1 // pred_check
      _
    $region15: #{network_forward.1} parent=1 // pred_check_branch
      %43 = sbr.rel (0) target = $region17
    $region16: #{network_forward.1} parent=1 // pred_region
      %s45 = ssub.s32 2048, 2048
      %46 = vsyncadd [#allocation6], %s45
      %s47 = sshll.u32 [#allocation7], 4
      %s48 = int_to_ptr.vmem [resolvable:$true] %s47
      %53 = dma.hbm_to_vmem [thread:$0]  %s3, 2048, %s48, [#allocation6], 128, 128, 8
    $region17: #{network_forward.1} parent=1 // pred_fallthru
      _
    // Predicated region
    $region18: #{network_forward.1} parent=1 // pred_check
      _
    $region19: #{network_forward.1} parent=1 // pred_check_branch
      %55 = sbr.rel (0) target = $region21
    $region20: #{network_forward.1} parent=1 // pred_region
      _
    $region21: #{network_forward.1} parent=1 // pred_fallthru
      _
    // Predicated region
    $region22: #{network_forward.1} parent=1 // pred_check
      _
    $region23: #{network_forward.1} parent=1 // pred_check_branch
      %57 = sbr.rel (0) target = $region25
    $region24: #{network_forward.1} parent=1 // pred_region
      %s59 = ssub.s32 2048, 2048
      %60 = vsyncadd [#allocation9], %s59
      %s61 = sshll.u32 [#allocation8], 4
      %s62 = int_to_ptr.vmem [resolvable:$true] %s61
      %67 = dma.hbm_to_vmem [thread:$0]  %s5, 2048, %s62, [#allocation9], 128, 128, 8
    $region25: #{network_forward.1} parent=1 // pred_fallthru
      _
    // Predicated region
    $region26: #{network_forward.1} parent=1 // pred_check
      _
    $region27: #{network_forward.1} parent=1 // pred_check_branch
      %69 = sbr.rel (0) target = $region29
    $region28: #{network_forward.1} parent=1 // pred_region
      _
    $region29: #{network_forward.1} parent=1 // pred_fallthru
      _
    // Predicated region
    $region30: #{network_forward.1} parent=1 // pred_check
      _
    $region31: #{network_forward.1} parent=1 // pred_check_branch
      %71 = sbr.rel (0) target = $region33
    $region32: #{network_forward.1} parent=1 // pred_region
      %72 = dma.done [#allocation3], 128
    $region33: #{network_forward.1} parent=1 // pred_fallthru
      _
    // Predicated region
    $region34: #{network_forward.1} parent=1 // pred_check
      _
    $region35: #{network_forward.1} parent=1 // pred_check_branch
      %74 = sbr.rel (0) target = $region37
    $region36: #{network_forward.1} parent=1 // pred_region
      %75 = dma.done [#allocation6], 512
    $region37: #{network_forward.1} parent=1 // pred_fallthru
      _
    // Predicated region
    $region38: #{network_forward.1} parent=1 // pred_check
      _
    $region39: #{network_forward.1} parent=1 // pred_check_branch
      %77 = sbr.rel (0) target = $region41
    $region40: #{network_forward.1} parent=1 // pred_region
      %78 = dma.done [#allocation6], 2048
    $region41: #{network_forward.1} parent=1 // pred_fallthru
      _
    // Predicated region
    $region42: #{network_forward.1} parent=1 // pred_check
      _
    $region43: #{network_forward.1} parent=1 // pred_check_branch
      %80 = sbr.rel (0) target = $region45
    $region44: #{network_forward.1} parent=1 // pred_region
      %81 = dma.done [#allocation9], 2048
    $region45: #{network_forward.1} parent=1 // pred_fallthru
      _
    %v82 = vld [vmem:[#allocation2] sm:$0xff]
    %v83 = vld [vmem:[#allocation5] sm:$0xff]
    %v84 = vld [vmem:[#allocation5 + $0x8] sm:$0xff]
    %v85 = vld [vmem:[#allocation5 + $0x10] sm:$0xff]
    %v86 = vld [vmem:[#allocation5 + $0x18] sm:$0xff]
    %v87 = vld [vmem:[%s2] sm:$0x1]
    %v89 = vlaneseq
    %v90 = vshrl.u32 %v89, 7
    %v91 = vsub.s32 0, %v90
    %v92 = vrot.slane %v87, %v91
    %vm94 = vcmask 261120
    %v96 = vsel %vm94, %v82, 0
    %98 = vmatprep.subr.mxu0 0.0
    %99 = vmatpush1.msra.mxu0 0.0
    %100 = vmatprep.subr.mxu0 0.0
    %101 = vmatpush1.msra.mxu0 0.0
    %102 = vmatprep.subr.mxu0 0.0
    %103 = vmatpush1.msra.mxu0 0.0
    %104 = vmatprep.subr.mxu0 0.0
    %105 = vmatpush1.msra.mxu0 0.0
    %106 = vmatprep.subr.mxu0 0.0
    %107 = vmatpush1.msra.mxu0 0.0
    %108 = vmatprep.subr.mxu0 0.0
    %109 = vmatpush1.msra.mxu0 0.0
    %110 = vmatprep.subr.mxu0 0.0
    %111 = vmatpush1.msra.mxu0 0.0
    %112 = vmatprep.subr.mxu0 0.0
    %113 = vmatpush1.msra.mxu0 0.0
    %114 = vmatprep.subr.mxu0 0.0
    %115 = vmatpush1.msra.mxu0 0.0
    %116 = vmatprep.subr.mxu0 0.0
    %117 = vmatpush1.msra.mxu0 0.0
    %118 = vmatprep.subr.mxu0 0.0
    %119 = vmatpush1.msra.mxu0 0.0
    %120 = vmatprep.subr.mxu0 0.0
    %121 = vmatpush1.msra.mxu0 0.0
    %122 = vmatprep.subr.mxu0 0.0
    %123 = vmatpush1.msra.mxu0 %v86
    %124 = vmatprep.subr.mxu0 0.0
    %125 = vmatpush1.msra.mxu0 %v85
    %126 = vmatprep.subr.mxu0 0.0
    %127 = vmatpush1.msra.mxu0 %v84
    %128 = vmatprep.subr.mxu0 0.0
    %129 = vmatpush1.msra.mxu0 %v83
    %130 = vmatprep.subr.mxu0 0.0
    %131 = vmatpush2.msra.mxu0 0.0
    %132 = vmatprep.subr.mxu0 0.0
    %133 = vmatpush2.msra.mxu0 0.0
    %134 = vmatprep.subr.mxu0 0.0
    %135 = vmatpush2.msra.mxu0 0.0
    %136 = vmatprep.subr.mxu0 0.0
    %137 = vmatpush2.msra.mxu0 0.0
    %138 = vmatprep.subr.mxu0 0.0
    %139 = vmatpush2.msra.mxu0 0.0
    %140 = vmatprep.subr.mxu0 0.0
    %141 = vmatpush2.msra.mxu0 0.0
    %142 = vmatprep.subr.mxu0 0.0
    %143 = vmatpush2.msra.mxu0 0.0
    %144 = vmatprep.subr.mxu0 0.0
    %145 = vmatpush2.msra.mxu0 0.0
    %146 = vmatprep.subr.mxu0 0.0
    %147 = vmatpush2.msra.mxu0 0.0
    %148 = vmatprep.subr.mxu0 0.0
    %149 = vmatpush2.msra.mxu0 0.0
    %150 = vmatprep.subr.mxu0 0.0
    %151 = vmatpush2.msra.mxu0 0.0
    %152 = vmatprep.subr.mxu0 0.0
    %153 = vmatpush2.msra.mxu0 0.0
    %154 = vmatprep.subr.mxu0 0.0
    %155 = vmatpush2.msra.mxu0 0.0
    %156 = vmatprep.subr.mxu0 0.0
    %157 = vmatpush2.msra.mxu0 0.0
    %158 = vmatprep.subr.mxu0 0.0
    %159 = vmatpush2.msra.mxu0 0.0
    %160 = vmatprep.subr.mxu0 0.0
    %161 = vmatpush2.msra.mxu0 0.0
    %162 = vmatprep.mubr.f32.mxu0 0.0
    %163 = vmatmul.mubr.f32.gmra.mxu0 %v96
    %v164 = vpop.f32.mrf.mxu0
    %v165 = vadd.f32 %v92, %v164
    %v166 = vpop.f32.mrf.mxu0
    %167 = vdwg.mxu0
    %v168 = vmax.f32 %v165, 0.0
    %v169 = vld [vmem:[#allocation7] sm:$0xff]
    %v170 = vld [vmem:[#allocation7 + $0x8] sm:$0xff]
    %v171 = vld [vmem:[#allocation7 + $0x10] sm:$0xff]
    %v172 = vld [vmem:[#allocation7 + $0x18] sm:$0xff]
    %v173 = vld [vmem:[#allocation7 + $0x20] sm:$0xff]
    %v174 = vld [vmem:[#allocation7 + $0x28] sm:$0xff]
    %v175 = vld [vmem:[#allocation7 + $0x30] sm:$0xff]
    %v176 = vld [vmem:[#allocation7 + $0x38] sm:$0xff]
    %v177 = vld [vmem:[#allocation7 + $0x40] sm:$0xff]
    %v178 = vld [vmem:[#allocation7 + $0x48] sm:$0xff]
    %v179 = vld [vmem:[#allocation7 + $0x50] sm:$0xff]
    %v180 = vld [vmem:[#allocation7 + $0x58] sm:$0xff]
    %v181 = vld [vmem:[#allocation7 + $0x60] sm:$0xff]
    %v182 = vld [vmem:[#allocation7 + $0x68] sm:$0xff]
    %v183 = vld [vmem:[#allocation7 + $0x70] sm:$0xff]
    %v184 = vld [vmem:[#allocation7 + $0x78] sm:$0xff]
    %v185 = vld [vmem:[%s4] sm:$0x1]
    %v187 = vlaneseq
    %v188 = vshrl.u32 %v187, 7
    %v189 = vsub.s32 0, %v188
    %v190 = vrot.slane %v185, %v189
    %192 = vmatprep.subr.mxu0 0.0
    %193 = vmatpush1.msra.mxu0 %v184
    %194 = vmatprep.subr.mxu0 0.0
    %195 = vmatpush1.msra.mxu0 %v183
    %196 = vmatprep.subr.mxu0 0.0
    %197 = vmatpush1.msra.mxu0 %v182
    %198 = vmatprep.subr.mxu0 0.0
    %199 = vmatpush1.msra.mxu0 %v181
    %200 = vmatprep.subr.mxu0 0.0
    %201 = vmatpush1.msra.mxu0 %v180
    %202 = vmatprep.subr.mxu0 0.0
    %203 = vmatpush1.msra.mxu0 %v179
    %204 = vmatprep.subr.mxu0 0.0
    %205 = vmatpush1.msra.mxu0 %v178
    %206 = vmatprep.subr.mxu0 0.0
    %207 = vmatpush1.msra.mxu0 %v177
    %208 = vmatprep.subr.mxu0 0.0
    %209 = vmatpush1.msra.mxu0 %v176
    %210 = vmatprep.subr.mxu0 0.0
    %211 = vmatpush1.msra.mxu0 %v175
    %212 = vmatprep.subr.mxu0 0.0
    %213 = vmatpush1.msra.mxu0 %v174
    %214 = vmatprep.subr.mxu0 0.0
    %215 = vmatpush1.msra.mxu0 %v173
    %216 = vmatprep.subr.mxu0 0.0
    %217 = vmatpush1.msra.mxu0 %v172
    %218 = vmatprep.subr.mxu0 0.0
    %219 = vmatpush1.msra.mxu0 %v171
    %220 = vmatprep.subr.mxu0 0.0
    %221 = vmatpush1.msra.mxu0 %v170
    %222 = vmatprep.subr.mxu0 0.0
    %223 = vmatpush1.msra.mxu0 %v169
    %224 = vmatprep.subr.mxu0 0.0
    %225 = vmatpush2.msra.mxu0 0.0
    %226 = vmatprep.subr.mxu0 0.0
    %227 = vmatpush2.msra.mxu0 0.0
    %228 = vmatprep.subr.mxu0 0.0
    %229 = vmatpush2.msra.mxu0 0.0
    %230 = vmatprep.subr.mxu0 0.0
    %231 = vmatpush2.msra.mxu0 0.0
    %232 = vmatprep.subr.mxu0 0.0
    %233 = vmatpush2.msra.mxu0 0.0
    %234 = vmatprep.subr.mxu0 0.0
    %235 = vmatpush2.msra.mxu0 0.0
    %236 = vmatprep.subr.mxu0 0.0
    %237 = vmatpush2.msra.mxu0 0.0
    %238 = vmatprep.subr.mxu0 0.0
    %239 = vmatpush2.msra.mxu0 0.0
    %240 = vmatprep.subr.mxu0 0.0
    %241 = vmatpush2.msra.mxu0 0.0
    %242 = vmatprep.subr.mxu0 0.0
    %243 = vmatpush2.msra.mxu0 0.0
    %244 = vmatprep.subr.mxu0 0.0
    %245 = vmatpush2.msra.mxu0 0.0
    %246 = vmatprep.subr.mxu0 0.0
    %247 = vmatpush2.msra.mxu0 0.0
    %248 = vmatprep.subr.mxu0 0.0
    %249 = vmatpush2.msra.mxu0 0.0
    %250 = vmatprep.subr.mxu0 0.0
    %251 = vmatpush2.msra.mxu0 0.0
    %252 = vmatprep.subr.mxu0 0.0
    %253 = vmatpush2.msra.mxu0 0.0
    %254 = vmatprep.subr.mxu0 0.0
    %255 = vmatpush2.msra.mxu0 0.0
    %256 = vmatprep.mubr.f32.mxu0 0.0
    %257 = vmatmul.mubr.f32.gmra.mxu0 %v168
    %v258 = vpop.f32.mrf.mxu0
    %v259 = vadd.f32 %v190, %v258
    %v260 = vpop.f32.mrf.mxu0
    %261 = vdwg.mxu0
    %v262 = vmax.f32 %v259, 0.0
    %v263 = vld [vmem:[#allocation8] sm:$0xff]
    %v264 = vld [vmem:[#allocation8 + $0x8] sm:$0xff]
    %v265 = vld [vmem:[#allocation8 + $0x10] sm:$0xff]
    %v266 = vld [vmem:[#allocation8 + $0x18] sm:$0xff]
    %v267 = vld [vmem:[#allocation8 + $0x20] sm:$0xff]
    %v268 = vld [vmem:[#allocation8 + $0x28] sm:$0xff]
    %v269 = vld [vmem:[#allocation8 + $0x30] sm:$0xff]
    %v270 = vld [vmem:[#allocation8 + $0x38] sm:$0xff]
    %v271 = vld [vmem:[#allocation8 + $0x40] sm:$0xff]
    %v272 = vld [vmem:[#allocation8 + $0x48] sm:$0xff]
    %v273 = vld [vmem:[#allocation8 + $0x50] sm:$0xff]
    %v274 = vld [vmem:[#allocation8 + $0x58] sm:$0xff]
    %v275 = vld [vmem:[#allocation8 + $0x60] sm:$0xff]
    %v276 = vld [vmem:[#allocation8 + $0x68] sm:$0xff]
    %v277 = vld [vmem:[#allocation8 + $0x70] sm:$0xff]
    %v278 = vld [vmem:[#allocation8 + $0x78] sm:$0xff]
    %v279 = vld [vmem:[%s6] sm:$0x1]
    %v281 = vlaneseq
    %v282 = vshrl.u32 %v281, 7
    %v283 = vsub.s32 0, %v282
    %v284 = vrot.slane %v279, %v283
    %286 = vmatprep.subr.mxu0 0.0
    %287 = vmatpush1.msra.mxu0 %v278
    %288 = vmatprep.subr.mxu0 0.0
    %289 = vmatpush1.msra.mxu0 %v277
    %290 = vmatprep.subr.mxu0 0.0
    %291 = vmatpush1.msra.mxu0 %v276
    %292 = vmatprep.subr.mxu0 0.0
    %293 = vmatpush1.msra.mxu0 %v275
    %294 = vmatprep.subr.mxu0 0.0
    %295 = vmatpush1.msra.mxu0 %v274
    %296 = vmatprep.subr.mxu0 0.0
    %297 = vmatpush1.msra.mxu0 %v273
    %298 = vmatprep.subr.mxu0 0.0
    %299 = vmatpush1.msra.mxu0 %v272
    %300 = vmatprep.subr.mxu0 0.0
    %301 = vmatpush1.msra.mxu0 %v271
    %302 = vmatprep.subr.mxu0 0.0
    %303 = vmatpush1.msra.mxu0 %v270
    %304 = vmatprep.subr.mxu0 0.0
    %305 = vmatpush1.msra.mxu0 %v269
    %306 = vmatprep.subr.mxu0 0.0
    %307 = vmatpush1.msra.mxu0 %v268
    %308 = vmatprep.subr.mxu0 0.0
    %309 = vmatpush1.msra.mxu0 %v267
    %310 = vmatprep.subr.mxu0 0.0
    %311 = vmatpush1.msra.mxu0 %v266
    %312 = vmatprep.subr.mxu0 0.0
    %313 = vmatpush1.msra.mxu0 %v265
    %314 = vmatprep.subr.mxu0 0.0
    %315 = vmatpush1.msra.mxu0 %v264
    %316 = vmatprep.subr.mxu0 0.0
    %317 = vmatpush1.msra.mxu0 %v263
    %318 = vmatprep.subr.mxu0 0.0
    %319 = vmatpush2.msra.mxu0 0.0
    %320 = vmatprep.subr.mxu0 0.0
    %321 = vmatpush2.msra.mxu0 0.0
    %322 = vmatprep.subr.mxu0 0.0
    %323 = vmatpush2.msra.mxu0 0.0
    %324 = vmatprep.subr.mxu0 0.0
    %325 = vmatpush2.msra.mxu0 0.0
    %326 = vmatprep.subr.mxu0 0.0
    %327 = vmatpush2.msra.mxu0 0.0
    %328 = vmatprep.subr.mxu0 0.0
    %329 = vmatpush2.msra.mxu0 0.0
    %330 = vmatprep.subr.mxu0 0.0
    %331 = vmatpush2.msra.mxu0 0.0
    %332 = vmatprep.subr.mxu0 0.0
    %333 = vmatpush2.msra.mxu0 0.0
    %334 = vmatprep.subr.mxu0 0.0
    %335 = vmatpush2.msra.mxu0 0.0
    %336 = vmatprep.subr.mxu0 0.0
    %337 = vmatpush2.msra.mxu0 0.0
    %338 = vmatprep.subr.mxu0 0.0
    %339 = vmatpush2.msra.mxu0 0.0
    %340 = vmatprep.subr.mxu0 0.0
    %341 = vmatpush2.msra.mxu0 0.0
    %342 = vmatprep.subr.mxu0 0.0
    %343 = vmatpush2.msra.mxu0 0.0
    %344 = vmatprep.subr.mxu0 0.0
    %345 = vmatpush2.msra.mxu0 0.0
    %346 = vmatprep.subr.mxu0 0.0
    %347 = vmatpush2.msra.mxu0 0.0
    %348 = vmatprep.subr.mxu0 0.0
    %349 = vmatpush2.msra.mxu0 0.0
    %350 = vmatprep.mubr.f32.mxu0 0.0
    %351 = vmatmul.mubr.f32.gmra.mxu0 %v262
    %v352 = vpop.f32.mrf.mxu0
    %v353 = vadd.f32 %v284, %v352
    %v354 = vpop.f32.mrf.mxu0
    %355 = vdwg.mxu0
    %356 = vst [vmem:[#allocation10] sm:$0xff] %v353
    // Predicated region
    $region46: #{network_forward.1} parent=1 // pred_check
      _
    $region47: #{network_forward.1} parent=1 // pred_check_branch
      %358 = sbr.rel (0) target = $region49
    $region48: #{network_forward.1} parent=1 // pred_region
      %s360 = ssub.s32 128, 32
      %361 = vsyncadd [#allocation4], %s360
      %s362 = sshll.u32 [#allocation10], 4
      %s363 = int_to_ptr.vmem [resolvable:$true] %s362
      %368 = dma.vmem_to_hbm [thread:$0]  %s363, 32, %s7, [#allocation4], 32, 32, 2
    $region49: #{network_forward.1} parent=1 // pred_fallthru
      _
    // Predicated region
    $region50: #{network_forward.1} parent=1 // pred_check
      _
    $region51: #{network_forward.1} parent=1 // pred_check_branch
      %370 = sbr.rel (0) target = $region53
    $region52: #{network_forward.1} parent=1 // pred_region
      %371 = dma.done [#allocation4], 128
    $region53: #{network_forward.1} parent=1 // pred_fallthru
      _
    %372 = vsyncpa [#allocation3], 1
    %373 = vsyncpa [#allocation6], 1
    %374 = vsyncpa [#allocation9], 1
    %375 = vsyncpa [#allocation4], 1

</llo_original>
